<compile_context>
chip_gen: v7x
topology: tpu7x:2x2x1
jax: 0.10.0
libtpu: 0.0.40
codegen_flags: <defaults>
</compile_context>

<pallas_src>
import math

import jax
import jax.numpy as jnp
from jax.experimental import pallas as pl
from jax.experimental.pallas import tpu as pltpu

_EPS = 1e-5
_TARGET_BLOCK_BYTES = 2 * 1024 * 1024          # ~2 MiB of input per grid step


def _round_up(x, m):
    return ((x + m - 1) // m) * m


def _sublane(dtype):
    # sub-32-bit dtypes pack along sublanes: bf16 vreg is [16,128], int8/fp8 [32,128]
    return {4: 8, 2: 16, 1: 32}.get(jnp.dtype(dtype).itemsize, 8)


def _vmem_bytes_per_elem(itemsize):
    # 2 double-buffered input blocks + 2 double-buffered output blocks (input dtype)
    # + ~3 block-sized f32 temporaries inside the kernel (x_f32, centered x, product).
    return 4 * itemsize + 3 * 4


_VMEM_LIMIT_CACHE = None


def _default_vmem_limit():
    """Generation-aware scoped VMEM limit: stay well under physical VMEM."""
    global _VMEM_LIMIT_CACHE
    if _VMEM_LIMIT_CACHE is not None:
        return _VMEM_LIMIT_CACHE
    cap = None
    try:
        cap = getattr(pltpu.get_tpu_info(), "vmem_capacity_bytes", None)
    except Exception:
        cap = None
    if cap is None:
        cap = 128 * 1024 * 1024
    # v7x: 64 MiB physical -> 40 MiB scoped; v5e/v6e: 128 MiB physical -> 64 MiB scoped.
    _VMEM_LIMIT_CACHE = (40 if cap <= 64 * 1024 * 1024 else 64) * 1024 * 1024
    return _VMEM_LIMIT_CACHE


_MULTI_TC_CACHE = None


def _is_multi_tc():
    """True on chips with >1 TensorCore (v7x); used only for even-grid work balancing."""
    global _MULTI_TC_CACHE
    if _MULTI_TC_CACHE is not None:
        return _MULTI_TC_CACHE
    multi = False
    try:
        info = pltpu.get_tpu_info()
        for name in ("num_cores", "core_count", "tensorcore_count", "num_tensorcores"):
            n = getattr(info, name, None)
            if n:
                multi = int(n) > 1
                break
    except Exception:
        pass
    if not multi:
        try:
            multi = "v7" in jax.devices()[0].device_kind.lower()
        except Exception:
            multi = False
    _MULTI_TC_CACHE = multi
    return multi


# ---------------------------------------------------------------------------
# Kernels (memory-bound; centered variance is free filler at the HBM roofline)
# ---------------------------------------------------------------------------
def _ln_channels_last_kernel(x_ref, w_ref, o_ref):
    x = x_ref[...].astype(jnp.float32)                   # (tile_rows, C)
    mean = jnp.mean(x, axis=-1, keepdims=True)
    xc = x - mean
    var = jnp.mean(xc * xc, axis=-1, keepdims=True)
    inv = jax.lax.rsqrt(var + _EPS)
    w = w_ref[...].astype(jnp.float32)                   # (1, C)
    o_ref[...] = (x * inv * w).astype(o_ref.dtype)       # mean NOT subtracted from x


def _ln_channel_axis_kernel(x_ref, w_ref, o_ref):
    x = x_ref[...].astype(jnp.float32)                   # (tile_b, C, tile_n)
    mean = jnp.mean(x, axis=-2, keepdims=True)
    xc = x - mean
    var = jnp.mean(xc * xc, axis=-2, keepdims=True)
    inv = jax.lax.rsqrt(var + _EPS)
    w = w_ref[...].astype(jnp.float32)                   # (1, C, 1)
    o_ref[...] = (x * inv * w).astype(o_ref.dtype)


# ---------------------------------------------------------------------------
# Tile selection
# ---------------------------------------------------------------------------
def _pick_rows_tile(rows, C, itemsize, sub, vmem_limit, target_bytes, multi_tc):
    hbm_per_row = max(1, C * itemsize)
    vmem_per_row = max(1, C * _vmem_bytes_per_elem(itemsize))
    tile = target_bytes // hbm_per_row
    tile = min(tile, vmem_limit // vmem_per_row)
    tile = max(sub, (tile // sub) * sub)
    if multi_tc and rows > sub:
        nb = pl.cdiv(rows, tile)
        if nb % 2 == 1 and nb < 8:
            # Round to an even number of blocks so both TensorCores get equal work.
            tile = max(sub, _round_up(pl.cdiv(rows, nb + 1), sub))
    if tile >= rows:
        tile = rows                                      # single full-extent block
    return tile


def _pick_lane_tiles(B, C, N, itemsize, vmem_limit, target_bytes, multi_tc):
    per_elem = _vmem_bytes_per_elem(itemsize)
    max_elems = min(target_bytes // itemsize, vmem_limit // per_elem)
    max_cols = max(128, max_elems // max(1, C))          # pixels per block

    n_al = _round_up(N, 128)
    tile_n = max(128, (min(max_cols, n_al) // 128) * 128)

    tile_b = 1
    if tile_n >= N and B > 1:
        # Small feature maps: also block over batch to keep >= ~target bytes per step.
        tile_b = min(B, max(1, max_cols // n_al))
        while B % tile_b:                                # keep batch blocks uniform
            tile_b -= 1

    if multi_tc:
        nb = pl.cdiv(B, tile_b) * pl.cdiv(N, tile_n)
        if nb % 2 == 1 and nb < 8:
            if pl.cdiv(B, tile_b) == 1 and B > 1:
                tile_b = max(1, pl.cdiv(B, 2))           # split batch across both TCs
            elif N > 128:
                n_blocks = pl.cdiv(N, tile_n) + 1
                tile_n = max(128, _round_up(pl.cdiv(N, n_blocks), 128))

    if tile_n >= N:
        tile_n = N                                       # full-extent lane block
    return tile_b, tile_n


# ---------------------------------------------------------------------------
# Public entry points
# ---------------------------------------------------------------------------
def bias_free_layernorm(x, weight, *, target_block_bytes=_TARGET_BLOCK_BYTES,
                        vmem_limit_bytes=None):
    """x: (..., C), weight: (C,). Mirrors BiasFree_LayerNorm exactly.

    For Restormer-style channel-first tensors prefer `bias_free_layernorm_nchw`
    (lane-dense I/O with no HBM transposes).
    """
    orig_shape = x.shape
    C = orig_shape[-1]
    assert weight.shape == (C,)
    rows = math.prod(orig_shape[:-1])
    x2d = x.reshape(rows, C)

    vmem_limit = vmem_limit_bytes or _default_vmem_limit()
    sub = _sublane(x.dtype)
    itemsize = jnp.dtype(x.dtype).itemsize
    tile_rows = _pick_rows_tile(rows, C, itemsize, sub, vmem_limit,
                                target_block_bytes, _is_multi_tc())
    grid = (pl.cdiv(rows, tile_rows),)                   # ragged last block is masked

    out = pl.pallas_call(
        _ln_channels_last_kernel,
        out_shape=jax.ShapeDtypeStruct((rows, C), x.dtype),
        grid_spec=pltpu.PrefetchScalarGridSpec(
            num_scalar_prefetch=0,
            grid=grid,
            in_specs=[
                pl.BlockSpec((tile_rows, C), lambda i: (i, 0)),
                pl.BlockSpec((1, C), lambda i: (0, 0)),  # tiny, constant across grid
            ],
            out_specs=pl.BlockSpec((tile_rows, C), lambda i: (i, 0)),
        ),
        compiler_params=pltpu.CompilerParams(
            dimension_semantics=("parallel",),
            vmem_limit_bytes=vmem_limit,
        ),
    )(x2d, weight.reshape(1, C))
    return out.reshape(orig_shape)


def bias_free_layernorm_nchw(x, weight, *, target_block_bytes=_TARGET_BLOCK_BYTES,
                             vmem_limit_bytes=None):
    """x: (B, C, H, W); normalize across C per pixel (== to_4d(LN(to_3d(x))) in Restormer).

    H*W sits on the 128-lane axis, so loads/stores are lane-dense even for C = 48/96/192.
    """
    B, C, H, W = x.shape
    assert weight.shape == (C,)
    N = H * W
    x3 = x.reshape(B, C, N)

    vmem_limit = vmem_limit_bytes or _default_vmem_limit()
    itemsize = jnp.dtype(x.dtype).itemsize
    tile_b, tile_n = _pick_lane_tiles(B, C, N, itemsize, vmem_limit,
                                      target_block_bytes, _is_multi_tc())
    grid = (pl.cdiv(B, tile_b), pl.cdiv(N, tile_n))      # ragged last lane block is masked

    out = pl.pallas_call(
        _ln_channel_axis_kernel,
        out_shape=jax.ShapeDtypeStruct((B, C, N), x.dtype),
        grid_spec=pltpu.PrefetchScalarGridSpec(
            num_scalar_prefetch=0,
            grid=grid,
            in_specs=[
                pl.BlockSpec((tile_b, C, tile_n), lambda b, j: (b, 0, j)),
                pl.BlockSpec((1, C, 1), lambda b, j: (0, 0, 0)),
            ],
            out_specs=pl.BlockSpec((tile_b, C, tile_n), lambda b, j: (b, 0, j)),
        ),
        compiler_params=pltpu.CompilerParams(
            dimension_semantics=("parallel", "parallel"),
            vmem_limit_bytes=vmem_limit,
        ),
    )(x3, weight.reshape(1, C, 1))
    return out.reshape(B, C, H, W)


# ---------------------------------------------------------------------------
# Pure-JAX references
# ---------------------------------------------------------------------------
def _reference(x, weight):
    x32 = x.astype(jnp.float32)
    mean = jnp.mean(x32, axis=-1, keepdims=True)
    var = jnp.mean((x32 - mean) ** 2, axis=-1, keepdims=True)
    return (x32 / jnp.sqrt(var + _EPS) * weight.astype(jnp.float32)).astype(x.dtype)


def _reference_nchw(x, weight):
    B, C, H, W = x.shape
    x3 = x.reshape(B, C, H * W).transpose(0, 2, 1)       # (B, HW, C)
    y = _reference(x3, weight)
    return y.transpose(0, 2, 1).reshape(B, C, H, W)


if __name__ == "__main__":
    key = jax.random.PRNGKey(0)
    k1, k2, k3, k4, kw = jax.random.split(key, 5)

    C = 48
    weight = 0.5 + jax.random.uniform(kw, (C,), dtype=jnp.float32)

    # --- Restormer fast path: lane-dense NCHW, C=48, small feature map (batch-blocked) ---
    x_nchw = jax.random.normal(k1, (2, C, 16, 16), dtype=jnp.float32) + 3.0  # mean offset
    out_cf = jax.block_until_ready(bias_free_layernorm_nchw(x_nchw, weight))
    ref_cf = _reference_nchw(x_nchw, weight)
    assert out_cf.shape == x_nchw.shape and out_cf.dtype == x_nchw.dtype
    assert jnp.allclose(out_cf, ref_cf, atol=1e-4, rtol=1e-4), "nchw f32 mismatch"

    # bf16 NCHW (sub-32-bit input; f32 math inside the kernel).
    xb = jax.random.normal(k2, (2, C, 16, 16), dtype=jnp.bfloat16)
    outb = jax.block_until_ready(bias_free_layernorm_nchw(xb, weight))
    assert outb.dtype == jnp.bfloat16
    assert jnp.allclose(outb.astype(jnp.float32),
                        _reference_nchw(xb, weight).astype(jnp.float32),
                        atol=3e-2, rtol=3e-2), "nchw bf16 mismatch"

    # --- Generic channels-last entry (mirrors the nn.Module): x = (B, H*W, C) ---
    x3 = jax.random.normal(k3, (2, 64, C), dtype=jnp.float32)
    out3 = jax.block_until_ready(bias_free_layernorm(x3, weight))
    assert out3.shape == x3.shape and out3.dtype == x3.dtype
    assert jnp.allclose(out3, _reference(x3, weight), atol=1e-4, rtol=1e-4), \
        "channels-last f32 mismatch"

    # C multiple of 128 + ragged row count (exercises masked last row block).
    C2 = 128
    w2 = 0.5 + jax.random.uniform(kw, (C2,), dtype=jnp.float32)
    x4 = jax.random.normal(k4, (3, 23, C2), dtype=jnp.float32)
    out4 = jax.block_until_ready(bias_free_layernorm(x4, w2))
    assert jnp.allclose(out4, _reference(x4, w2), atol=1e-4, rtol=1e-4), \
        "ragged channels-last mismatch"

    print("KERNEL_OK")
</pallas_src>

<mosaic_0001>
module attributes {stable_mosaic.version = 11 : i64} {
  func.func @_ln_channel_axis_kernel(%arg0: i32, %arg1: i32, %arg2: memref<2x48x256xf32, #tpu.memory_space<vmem>>, %arg3: memref<1x48x1xf32, #tpu.memory_space<vmem>>, %arg4: memref<2x48x256xf32, #tpu.memory_space<vmem>>) attributes {dimension_semantics = [#tpu.dimension_semantics<parallel>, #tpu.dimension_semantics<parallel>], iteration_bounds = array<i64: 1, 1>, scalar_prefetch = 0 : i64, scratch_operands = 0 : i64, tpu.core_type = #tpu.core_type<tc>, window_params = [{transform_indices = @transform_0, window_bounds = array<i64: 2, 48, 256>}, {pipeline_mode = #tpu.pipeline_mode<synchronous>, transform_indices = @transform_1, window_bounds = array<i64: 1, 48, 1>}, {transform_indices = @transform_2, window_bounds = array<i64: 2, 48, 256>}]} {
    %c0 = arith.constant 0 : index
    %c0_0 = arith.constant 0 : index
    %c0_1 = arith.constant 0 : index
    %0 = vector.load %arg2[%c0, %c0_0, %c0_1] : memref<2x48x256xf32, #tpu.memory_space<vmem>>, vector<2x48x256xf32>
    %cst = arith.constant dense<0.000000e+00> : vector<2x256xf32>
    %1 = vector.multi_reduction <add>, %0, %cst [1] : vector<2x48x256xf32> to vector<2x256xf32>
    %2 = vector.shape_cast %1 : vector<2x256xf32> to vector<2x1x256xf32>
    %cst_2 = arith.constant 4.800000e+01 : f32
    %3 = vector.broadcast %cst_2 : f32 to vector<2x1x256xf32>
    %4 = arith.divf %2, %3 : vector<2x1x256xf32>
    %5 = vector.broadcast %4 : vector<2x1x256xf32> to vector<2x48x256xf32>
    %6 = arith.subf %0, %5 : vector<2x48x256xf32>
    %7 = arith.mulf %6, %6 : vector<2x48x256xf32>
    %cst_3 = arith.constant dense<0.000000e+00> : vector<2x256xf32>
    %8 = vector.multi_reduction <add>, %7, %cst_3 [1] : vector<2x48x256xf32> to vector<2x256xf32>
    %9 = vector.shape_cast %8 : vector<2x256xf32> to vector<2x1x256xf32>
    %cst_4 = arith.constant 4.800000e+01 : f32
    %10 = vector.broadcast %cst_4 : f32 to vector<2x1x256xf32>
    %11 = arith.divf %9, %10 : vector<2x1x256xf32>
    %cst_5 = arith.constant 9.99999974E-6 : f32
    %12 = vector.broadcast %cst_5 : f32 to vector<2x1x256xf32>
    %13 = arith.addf %11, %12 : vector<2x1x256xf32>
    %14 = math.rsqrt %13 : vector<2x1x256xf32>
    %c0_6 = arith.constant 0 : index
    %c0_7 = arith.constant 0 : index
    %c0_8 = arith.constant 0 : index
    %15 = vector.load %arg3[%c0_6, %c0_7, %c0_8] : memref<1x48x1xf32, #tpu.memory_space<vmem>>, vector<1x48x1xf32>
    %16 = vector.broadcast %14 : vector<2x1x256xf32> to vector<2x48x256xf32>
    %17 = arith.mulf %0, %16 : vector<2x48x256xf32>
    %18 = vector.broadcast %15 : vector<1x48x1xf32> to vector<2x48x256xf32>
    %19 = arith.mulf %17, %18 : vector<2x48x256xf32>
    %c0_9 = arith.constant 0 : index
    %c0_10 = arith.constant 0 : index
    %c0_11 = arith.constant 0 : index
    %20 = vector.load %arg4[%c0_9, %c0_10, %c0_11] : memref<2x48x256xf32, #tpu.memory_space<vmem>>, vector<2x48x256xf32>
    tpu.vector_store %arg4[%c0_9, %c0_10, %c0_11], %19 {strides = array<i32>} : memref<2x48x256xf32, #tpu.memory_space<vmem>>, vector<2x48x256xf32>,
    return
  }
  func.func @transform_0(%arg0: i32, %arg1: i32) -> (i32, i32, i32) {
    %c0_i32 = arith.constant 0 : i32
    %c0_i32_0 = arith.constant 0 : i32
    return %arg0, %c0_i32, %arg1 : i32, i32, i32
  }
  func.func @transform_1(%arg0: i32, %arg1: i32) -> (i32, i32, i32) {
    %c0_i32 = arith.constant 0 : i32
    %c0_i32_0 = arith.constant 0 : i32
    %c0_i32_1 = arith.constant 0 : i32
    %c0_i32_2 = arith.constant 0 : i32
    return %c0_i32, %c0_i32_0, %c0_i32_1 : i32, i32, i32
  }
  func.func @transform_2(%arg0: i32, %arg1: i32) -> (i32, i32, i32) {
    %c0_i32 = arith.constant 0 : i32
    %c0_i32_0 = arith.constant 0 : i32
    return %arg0, %c0_i32, %arg1 : i32, i32, i32
  }
}

</mosaic_0001>

<llo_original>
// kernel: tpu_custom_call.1
$region0: #{tpu_custom_call.1}
  #allocation0 [shape = 'u32[]', space=smem, size = 0x4, offset = 0x4, fixed_abs, tag = 'smem constant byte address 0x4 - core index']
  #allocation1 [shape = 'u32[144,128]{1,0:T(1,128)}', space=vmem, size = 0x12000, scoped, tag = 'internal scratch']
  %s0 = inlined_call_operand.hbm [shape: f32[2,48,256], index: 0, kind: input, shape index: {}]
  %s1 = inlined_call_operand.hbm [shape: f32[1,48,1], index: 1, kind: input, shape index: {}]
  %s2 = inlined_call_operand.hbm [shape: f32[2,48,256], index: 2, kind: output, shape index: {}]
  %s3 = sld [smem:[#allocation0]]
  $region26: #{tpu_custom_call.1} parent=0
    _
  %s5 = ssub.s32 1, %s3
  %s6 = scalar_select 0, %s5, %s3
  $region1: #{tpu_custom_call.1} parent=0
    #allocation2 [shape = 'u8[98304]{0}', space=vmem, size = 0x18000, scoped, tag = 'input window, operand 0, single buffered']
    #allocation3 [shape = 's32[1]{0}', space=sflag, size = 0x4, scoped, tag = 'scoped memory for tpu_custom_call.1']
    #allocation4 [shape = 's32[1]{0}', space=sflag, size = 0x4, scoped, tag = 'scoped memory for tpu_custom_call.1']
    #allocation5 [shape = 'u8[24576]{0}', space=vmem, size = 0x6000, scoped, tag = 'input window, operand 1, single buffered']
    #allocation6 [shape = 's32[1]{0}', space=sflag, size = 0x4, scoped, tag = 'scoped memory for tpu_custom_call.1']
    #allocation7 [shape = 'u8[98304]{0}', space=vmem, size = 0x18000, scoped, tag = 'output window, operand 0, single buffered']
    %7 = vsyncpa [#allocation3], 0
    %8 = vsyncpa [#allocation6], 0
    %9 = vsyncpa [#allocation4], 0
    // Predicated region
    $region2: #{tpu_custom_call.1} parent=1 // pred_check
      _
    $region3: #{tpu_custom_call.1} parent=1 // pred_check_branch
      %11 = sbr.rel (0) target = $region5
    $region4: #{tpu_custom_call.1} parent=1 // pred_region
      %s13 = ssub.s32 3072, 3072
      %14 = vsyncadd [#allocation3], %s13
      %s15 = sshll.u32 [#allocation2], 4
      %s16 = int_to_ptr.vmem [resolvable:$true] %s15
      %21 = dma.hbm_to_vmem [thread:$0]  %s0, 3072, %s16, [#allocation3], 256, 256, 16
    $region5: #{tpu_custom_call.1} parent=1 // pred_fallthru
      _
    // Predicated region
    $region6: #{tpu_custom_call.1} parent=1 // pred_check
      _
    $region7: #{tpu_custom_call.1} parent=1 // pred_check_branch
      %23 = sbr.rel (0) target = $region9
    $region8: #{tpu_custom_call.1} parent=1 // pred_region
      %s25 = ssub.s32 768, 768
      %26 = vsyncadd [#allocation6], %s25
      %s27 = sshll.u32 [#allocation5], 4
      %s28 = int_to_ptr.vmem [resolvable:$true] %s27
      %33 = dma.hbm_to_vmem [thread:$0]  %s1, 768, %s28, [#allocation6], 128, 128, 8
    $region9: #{tpu_custom_call.1} parent=1 // pred_fallthru
      _
    // Predicated region
    $region10: #{tpu_custom_call.1} parent=1 // pred_check
      _
    $region11: #{tpu_custom_call.1} parent=1 // pred_check_branch
      %35 = sbr.rel (0) target = $region13
    $region12: #{tpu_custom_call.1} parent=1 // pred_region
      %36 = dma.done [#allocation3], 3072
    $region13: #{tpu_custom_call.1} parent=1 // pred_fallthru
      _
    // Predicated region
    $region14: #{tpu_custom_call.1} parent=1 // pred_check
      _
    $region15: #{tpu_custom_call.1} parent=1 // pred_check_branch
      %38 = sbr.rel (0) target = $region17
    $region16: #{tpu_custom_call.1} parent=1 // pred_region
      %39 = dma.done [#allocation6], 768
    $region17: #{tpu_custom_call.1} parent=1 // pred_fallthru
      _
    %v40 = vld [vmem:[#allocation2] sm:$0xff]
    %v41 = vld [vmem:[#allocation2 + $0x8] sm:$0xff]
    %v42 = vld [vmem:[#allocation2 + $0x10] sm:$0xff]
    %v43 = vld [vmem:[#allocation2 + $0x18] sm:$0xff]
    %v44 = vld [vmem:[#allocation2 + $0x20] sm:$0xff]
    %v45 = vld [vmem:[#allocation2 + $0x28] sm:$0xff]
    %v46 = vld [vmem:[#allocation2 + $0x30] sm:$0xff]
    %v47 = vld [vmem:[#allocation2 + $0x38] sm:$0xff]
    %v48 = vld [vmem:[#allocation2 + $0x40] sm:$0xff]
    %v49 = vld [vmem:[#allocation2 + $0x48] sm:$0xff]
    %v50 = vld [vmem:[#allocation2 + $0x50] sm:$0xff]
    %v51 = vld [vmem:[#allocation2 + $0x58] sm:$0xff]
    %v52 = vld [vmem:[#allocation2 + $0x60] sm:$0xff]
    %v53 = vld [vmem:[#allocation2 + $0x68] sm:$0xff]
    %v54 = vld [vmem:[#allocation2 + $0x70] sm:$0xff]
    %v55 = vld [vmem:[#allocation2 + $0x78] sm:$0xff]
    %v56 = vld [vmem:[#allocation2 + $0x80] sm:$0xff]
    %v57 = vld [vmem:[#allocation2 + $0x88] sm:$0xff]
    %v58 = vld [vmem:[#allocation2 + $0x90] sm:$0xff]
    %v59 = vld [vmem:[#allocation2 + $0x98] sm:$0xff]
    %v60 = vld [vmem:[#allocation2 + $0xa0] sm:$0xff]
    %v61 = vld [vmem:[#allocation2 + $0xa8] sm:$0xff]
    %v62 = vld [vmem:[#allocation2 + $0xb0] sm:$0xff]
    %v63 = vld [vmem:[#allocation2 + $0xb8] sm:$0xff]
    %v64 = vadd.f32 %v40, %v42
    %v65 = vadd.f32 %v64, %v44
    %v66 = vadd.f32 %v65, %v46
    %v67 = vadd.f32 %v66, %v48
    %v68 = vadd.f32 %v67, %v50
    %v69 = vrot.slane %v68, 4
    %v70 = vadd.f32 %v68, %v69
    %v71 = vrot.slane %v70, 2
    %v72 = vadd.f32 %v70, %v71
    %v73 = vrot.slane %v72, 1
    %v74 = vadd.f32 %v72, %v73
    %v75 = vadd.f32 %v41, %v43
    %v76 = vadd.f32 %v75, %v45
    %v77 = vadd.f32 %v76, %v47
    %v78 = vadd.f32 %v77, %v49
    %v79 = vadd.f32 %v78, %v51
    %v80 = vrot.slane %v79, 4
    %v81 = vadd.f32 %v79, %v80
    %v82 = vrot.slane %v81, 2
    %v83 = vadd.f32 %v81, %v82
    %v84 = vrot.slane %v83, 1
    %v85 = vadd.f32 %v83, %v84
    %v86 = vadd.f32 %v52, %v54
    %v87 = vadd.f32 %v86, %v56
    %v88 = vadd.f32 %v87, %v58
    %v89 = vadd.f32 %v88, %v60
    %v90 = vadd.f32 %v89, %v62
    %v91 = vrot.slane %v90, 4
    %v92 = vadd.f32 %v90, %v91
    %v93 = vrot.slane %v92, 2
    %v94 = vadd.f32 %v92, %v93
    %v95 = vrot.slane %v94, 1
    %v96 = vadd.f32 %v94, %v95
    %v97 = vadd.f32 %v53, %v55
    %v98 = vadd.f32 %v97, %v57
    %v99 = vadd.f32 %v98, %v59
    %v100 = vadd.f32 %v99, %v61
    %v101 = vadd.f32 %v100, %v63
    %v102 = vrot.slane %v101, 4
    %v103 = vadd.f32 %v101, %v102
    %v104 = vrot.slane %v103, 2
    %v105 = vadd.f32 %v103, %v104
    %v106 = vrot.slane %v105, 1
    %v107 = vadd.f32 %v105, %v106
    %v108 = vrcp.pop 48.0
    %v109 = vmul.f32 %v74, %v108
    %v110 = vmul.f32 %v85, %v108
    %v111 = vmul.f32 %v96, %v108
    %v112 = vmul.f32 %v107, %v108
    %v113 = vsub.f32 %v40, %v109
    %v114 = vsub.f32 %v41, %v110
    %v115 = vsub.f32 %v42, %v109
    %v116 = vsub.f32 %v43, %v110
    %v117 = vsub.f32 %v44, %v109
    %v118 = vsub.f32 %v45, %v110
    %v119 = vsub.f32 %v46, %v109
    %v120 = vsub.f32 %v47, %v110
    %v121 = vsub.f32 %v48, %v109
    %v122 = vsub.f32 %v49, %v110
    %v123 = vsub.f32 %v50, %v109
    %v124 = vsub.f32 %v51, %v110
    %v125 = vsub.f32 %v52, %v111
    %v126 = vsub.f32 %v53, %v112
    %v127 = vsub.f32 %v54, %v111
    %v128 = vsub.f32 %v55, %v112
    %v129 = vsub.f32 %v56, %v111
    %v130 = vsub.f32 %v57, %v112
    %v131 = vsub.f32 %v58, %v111
    %v132 = vsub.f32 %v59, %v112
    %v133 = vsub.f32 %v60, %v111
    %v134 = vsub.f32 %v61, %v112
    %v135 = vsub.f32 %v62, %v111
    %v136 = vsub.f32 %v63, %v112
    %v137 = vmul.f32 %v113, %v113
    %v138 = vmul.f32 %v114, %v114
    %v139 = vmul.f32 %v115, %v115
    %v140 = vmul.f32 %v116, %v116
    %v141 = vmul.f32 %v117, %v117
    %v142 = vmul.f32 %v118, %v118
    %v143 = vmul.f32 %v119, %v119
    %v144 = vmul.f32 %v120, %v120
    %v145 = vmul.f32 %v121, %v121
    %v146 = vmul.f32 %v122, %v122
    %v147 = vmul.f32 %v123, %v123
    %v148 = vmul.f32 %v124, %v124
    %v149 = vmul.f32 %v125, %v125
    %v150 = vmul.f32 %v126, %v126
    %v151 = vmul.f32 %v127, %v127
    %v152 = vmul.f32 %v128, %v128
    %v153 = vmul.f32 %v129, %v129
    %v154 = vmul.f32 %v130, %v130
    %v155 = vmul.f32 %v131, %v131
    %v156 = vmul.f32 %v132, %v132
    %v157 = vmul.f32 %v133, %v133
    %v158 = vmul.f32 %v134, %v134
    %v159 = vmul.f32 %v135, %v135
    %v160 = vmul.f32 %v136, %v136
    %v161 = vadd.f32 %v137, %v139
    %v162 = vadd.f32 %v161, %v141
    %v163 = vadd.f32 %v162, %v143
    %v164 = vadd.f32 %v163, %v145
    %v165 = vadd.f32 %v164, %v147
    %v166 = vrot.slane %v165, 4
    %v167 = vadd.f32 %v165, %v166
    %v168 = vrot.slane %v167, 2
    %v169 = vadd.f32 %v167, %v168
    %v170 = vrot.slane %v169, 1
    %v171 = vadd.f32 %v169, %v170
    %v172 = vadd.f32 %v138, %v140
    %v173 = vadd.f32 %v172, %v142
    %v174 = vadd.f32 %v173, %v144
    %v175 = vadd.f32 %v174, %v146
    %v176 = vadd.f32 %v175, %v148
    %v177 = vrot.slane %v176, 4
    %v178 = vadd.f32 %v176, %v177
    %v179 = vrot.slane %v178, 2
    %v180 = vadd.f32 %v178, %v179
    %v181 = vrot.slane %v180, 1
    %v182 = vadd.f32 %v180, %v181
    %v183 = vadd.f32 %v149, %v151
    %v184 = vadd.f32 %v183, %v153
    %v185 = vadd.f32 %v184, %v155
    %v186 = vadd.f32 %v185, %v157
    %v187 = vadd.f32 %v186, %v159
    %v188 = vrot.slane %v187, 4
    %v189 = vadd.f32 %v187, %v188
    %v190 = vrot.slane %v189, 2
    %v191 = vadd.f32 %v189, %v190
    %v192 = vrot.slane %v191, 1
    %v193 = vadd.f32 %v191, %v192
    %v194 = vadd.f32 %v150, %v152
    %v195 = vadd.f32 %v194, %v154
    %v196 = vadd.f32 %v195, %v156
    %v197 = vadd.f32 %v196, %v158
    %v198 = vadd.f32 %v197, %v160
    %v199 = vrot.slane %v198, 4
    %v200 = vadd.f32 %v198, %v199
    %v201 = vrot.slane %v200, 2
    %v202 = vadd.f32 %v200, %v201
    %v203 = vrot.slane %v202, 1
    %v204 = vadd.f32 %v202, %v203
    %v205 = vmul.f32 %v171, %v108
    %v206 = vmul.f32 %v182, %v108
    %v207 = vmul.f32 %v193, %v108
    %v208 = vmul.f32 %v204, %v108
    %v209 = vadd.f32 %v205, 1e-05
    %v210 = vadd.f32 %v206, 1e-05
    %v211 = vadd.f32 %v207, 1e-05
    %v212 = vadd.f32 %v208, 1e-05
    %v213 = vrsqrt.pop %v209
    %v214 = vrsqrt.pop %v210
    %v215 = vrsqrt.pop %v211
    %v216 = vrsqrt.pop %v212
    %v217 = vld [vmem:[#allocation5] sm:$0xff]
    %v218 = vld [vmem:[#allocation5 + $0x8] sm:$0xff]
    %v219 = vld [vmem:[#allocation5 + $0x10] sm:$0xff]
    %v220 = vld [vmem:[#allocation5 + $0x18] sm:$0xff]
    %v221 = vld [vmem:[#allocation5 + $0x20] sm:$0xff]
    %v222 = vld [vmem:[#allocation5 + $0x28] sm:$0xff]
    %v223 = vmul.f32 %v40, %v213
    %v224 = vmul.f32 %v41, %v214
    %v225 = vmul.f32 %v42, %v213
    %v226 = vmul.f32 %v43, %v214
    %v227 = vmul.f32 %v44, %v213
    %v228 = vmul.f32 %v45, %v214
    %v229 = vmul.f32 %v46, %v213
    %v230 = vmul.f32 %v47, %v214
    %v231 = vmul.f32 %v48, %v213
    %v232 = vmul.f32 %v49, %v214
    %v233 = vmul.f32 %v50, %v213
    %v234 = vmul.f32 %v51, %v214
    %v235 = vmul.f32 %v52, %v215
    %v236 = vmul.f32 %v53, %v216
    %v237 = vmul.f32 %v54, %v215
    %v238 = vmul.f32 %v55, %v216
    %v239 = vmul.f32 %v56, %v215
    %v240 = vmul.f32 %v57, %v216
    %v241 = vmul.f32 %v58, %v215
    %v242 = vmul.f32 %v59, %v216
    %v243 = vmul.f32 %v60, %v215
    %v244 = vmul.f32 %v61, %v216
    %v245 = vmul.f32 %v62, %v215
    %v246 = vmul.f32 %v63, %v216
    %248 = vset.pattern.permute.xlu0 0
    %249 = vperm.xlu0 %248, %v217
    %v250 = vpop.permute.xlu0 %249
    %253 = vset.pattern.permute.xlu0 0
    %254 = vperm.xlu0 %253, %v218
    %v255 = vpop.permute.xlu0 %254
    %258 = vset.pattern.permute.xlu0 0
    %259 = vperm.xlu0 %258, %v219
    %v260 = vpop.permute.xlu0 %259
    %263 = vset.pattern.permute.xlu0 0
    %264 = vperm.xlu0 %263, %v220
    %v265 = vpop.permute.xlu0 %264
    %268 = vset.pattern.permute.xlu0 0
    %269 = vperm.xlu0 %268, %v221
    %v270 = vpop.permute.xlu0 %269
    %273 = vset.pattern.permute.xlu0 0
    %274 = vperm.xlu0 %273, %v222
    %v275 = vpop.permute.xlu0 %274
    %v277 = vmul.f32 %v223, %v250
    %v278 = vmul.f32 %v224, %v250
    %v279 = vmul.f32 %v225, %v255
    %v280 = vmul.f32 %v226, %v255
    %v281 = vmul.f32 %v227, %v260
    %v282 = vmul.f32 %v228, %v260
    %v283 = vmul.f32 %v229, %v265
    %v284 = vmul.f32 %v230, %v265
    %v285 = vmul.f32 %v231, %v270
    %v286 = vmul.f32 %v232, %v270
    %v287 = vmul.f32 %v233, %v275
    %v288 = vmul.f32 %v234, %v275
    %v289 = vmul.f32 %v235, %v250
    %v290 = vmul.f32 %v236, %v250
    %v291 = vmul.f32 %v237, %v255
    %v292 = vmul.f32 %v238, %v255
    %v293 = vmul.f32 %v239, %v260
    %v294 = vmul.f32 %v240, %v260
    %v295 = vmul.f32 %v241, %v265
    %v296 = vmul.f32 %v242, %v265
    %v297 = vmul.f32 %v243, %v270
    %v298 = vmul.f32 %v244, %v270
    %v299 = vmul.f32 %v245, %v275
    %v300 = vmul.f32 %v246, %v275
    %301 = vst [vmem:[#allocation7] sm:$0xff] %v277
    %302 = vst [vmem:[#allocation7 + $0x8] sm:$0xff] %v278
    %303 = vst [vmem:[#allocation7 + $0x10] sm:$0xff] %v279
    %304 = vst [vmem:[#allocation7 + $0x18] sm:$0xff] %v280
    %305 = vst [vmem:[#allocation7 + $0x20] sm:$0xff] %v281
    %306 = vst [vmem:[#allocation7 + $0x28] sm:$0xff] %v282
    %307 = vst [vmem:[#allocation7 + $0x30] sm:$0xff] %v283
    %308 = vst [vmem:[#allocation7 + $0x38] sm:$0xff] %v284
    %309 = vst [vmem:[#allocation7 + $0x40] sm:$0xff] %v285
    %310 = vst [vmem:[#allocation7 + $0x48] sm:$0xff] %v286
    %311 = vst [vmem:[#allocation7 + $0x50] sm:$0xff] %v287
    %312 = vst [vmem:[#allocation7 + $0x58] sm:$0xff] %v288
    %313 = vst [vmem:[#allocation7 + $0x60] sm:$0xff] %v289
    %314 = vst [vmem:[#allocation7 + $0x68] sm:$0xff] %v290
    %315 = vst [vmem:[#allocation7 + $0x70] sm:$0xff] %v291
    %316 = vst [vmem:[#allocation7 + $0x78] sm:$0xff] %v292
    %317 = vst [vmem:[#allocation7 + $0x80] sm:$0xff] %v293
    %318 = vst [vmem:[#allocation7 + $0x88] sm:$0xff] %v294
    %319 = vst [vmem:[#allocation7 + $0x90] sm:$0xff] %v295
    %320 = vst [vmem:[#allocation7 + $0x98] sm:$0xff] %v296
    %321 = vst [vmem:[#allocation7 + $0xa0] sm:$0xff] %v297
    %322 = vst [vmem:[#allocation7 + $0xa8] sm:$0xff] %v298
    %323 = vst [vmem:[#allocation7 + $0xb0] sm:$0xff] %v299
    %324 = vst [vmem:[#allocation7 + $0xb8] sm:$0xff] %v300
    // Predicated region
    $region18: #{tpu_custom_call.1} parent=1 // pred_check
      _
    $region19: #{tpu_custom_call.1} parent=1 // pred_check_branch
      %326 = sbr.rel (0) target = $region21
    $region20: #{tpu_custom_call.1} parent=1 // pred_region
      %s328 = ssub.s32 3072, 3072
      %329 = vsyncadd [#allocation4], %s328
      %s330 = sshll.u32 [#allocation7], 4
      %s331 = int_to_ptr.vmem [resolvable:$true] %s330
      %336 = dma.vmem_to_hbm [thread:$0]  %s331, 3072, %s2, [#allocation4], 256, 256, 16
    $region21: #{tpu_custom_call.1} parent=1 // pred_fallthru
      _
    // Predicated region
    $region22: #{tpu_custom_call.1} parent=1 // pred_check
      _
    $region23: #{tpu_custom_call.1} parent=1 // pred_check_branch
      %338 = sbr.rel (0) target = $region25
    $region24: #{tpu_custom_call.1} parent=1 // pred_region
      %339 = dma.done [#allocation4], 3072
    $region25: #{tpu_custom_call.1} parent=1 // pred_fallthru
      _
    %340 = vsyncpa [#allocation3], 1
    %341 = vsyncpa [#allocation6], 1
    %342 = vsyncpa [#allocation4], 1

</llo_original>
